<compile_context>
chip_gen: v5e
topology: v5e:2x2
jax: 0.10.0
libtpu: 0.0.40
codegen_flags: <defaults>
</compile_context>

<pallas_src>
import jax
import jax.numpy as jnp
from jax.experimental import pallas as pl
from jax.experimental.pallas import tpu as pltpu


def _round_up(v, m):
    return ((v + m - 1) // m) * m


def _make_kernel(bt, c, r, hw):
    inv_hw = 1.0 / float(hw)

    def kernel(x_ref, w1t_ref, b1_ref, w2t_ref, b2_ref, o_ref):
        x_nat = x_ref[...]                                   # (Bt, C, HW), input dtype
        xf = x_nat.astype(jnp.float32)

        # --- AdaptiveAvgPool2d(1) / AdaptiveMaxPool2d(1): reduce over spatial ---
        avg = jnp.sum(xf, axis=-1) * inv_hw                  # (Bt, C)  f32
        mx = jnp.max(xf, axis=-1)                            # (Bt, C)  f32

        # --- shared MLP on stacked avg/max rows: one 2-D matmul per layer ---
        pooled = jnp.concatenate([avg, mx], axis=0)          # (2*Bt, C)
        h = jnp.dot(pooled, w1t_ref[...],
                    preferred_element_type=jnp.float32) + b1_ref[...]   # (2*Bt, R)
        h = jnp.where(h >= 0.0, h, 0.1 * h)                  # LeakyReLU(0.1)
        y2 = jnp.dot(h, w2t_ref[...],
                     preferred_element_type=jnp.float32) + b2_ref[...]  # (2*Bt, C)

        # fc(avg) + fc(max): each half already carries +b2, so the sum
        # reproduces the reference's doubled bias.
        y = y2[:bt] + y2[bt:]                                # (Bt, C)
        scale = (2.0 * jax.nn.sigmoid(y)).astype(x_nat.dtype)

        o_ref[...] = x_nat * scale[:, :, None]               # broadcast over HW

    return kernel


def channel_attention(x, w1, b1, w2, b2):
    """x: (B, C, H, W). Returns x * 2*sigmoid(fc(avgpool(x)) + fc(maxpool(x)))."""
    B, C, H, W = x.shape
    R = w1.shape[0]
    HW = H * W
    itemsize = jnp.dtype(x.dtype).itemsize

    x_flat = x.reshape(B, C, HW)                 # free view (contiguous)

    # --- generation-aware VMEM budget -> batch tile Bt (a divisor of B) ---
    try:
        vmem_cap = int(pltpu.get_tpu_info().vmem_capacity_bytes)
    except Exception:
        vmem_cap = 64 * 1024 * 1024              # conservative (v7x-sized) fallback
    budget = int(0.62 * vmem_cap)                # ~40 MiB on v7x, ~79 MiB on v5e/v6e

    c_sub = _round_up(max(C, 8), 8)              # sublane-padded channel rows in VMEM
    hw_lane = _round_up(HW, 128)                 # lane-padded spatial cols in VMEM
    slab_elems = c_sub * hw_lane                 # per-batch-element VMEM footprint
    # double-buffered in + out slabs, plus ~2 slab-sized f32 temporaries (xf, product)
    per_b_total = 4 * slab_elems * itemsize + 2 * slab_elems * 4
    bt_cap = max(1, budget // per_b_total)

    divisors = [d for d in range(1, B + 1) if B % d == 0]
    cands = [d for d in divisors if d <= bt_cap and (B < 2 or d <= B // 2)]
    bt = max(cands) if cands else 1              # bt divides B -> no batch padding

    needed = bt * per_b_total + 4 * 1024 * 1024
    vmem_limit = int(min(vmem_cap, max(32 * 1024 * 1024, needed)))

    # Weights pre-transposed / biases row-broadcastable, all f32 (tiny, resident).
    w1t = w1.T.astype(jnp.float32)               # (C, R)
    w2t = w2.T.astype(jnp.float32)               # (R, C)
    b1r = b1.reshape(1, R).astype(jnp.float32)
    b2r = b2.reshape(1, C).astype(jnp.float32)

    cost = pl.CostEstimate(
        flops=int(3 * B * C * HW + 8 * B * C * R),
        transcendentals=int(B * C),
        bytes_accessed=int(2 * B * C * HW * itemsize + (2 * R * C + R + C) * 4),
    )

    kernel = _make_kernel(bt, C, R, HW)

    out_flat = pl.pallas_call(
        kernel,
        out_shape=jax.ShapeDtypeStruct((B, C, HW), x.dtype),
        grid_spec=pltpu.PrefetchScalarGridSpec(
            num_scalar_prefetch=0,
            grid=(B // bt,),
            in_specs=[
                pl.BlockSpec((bt, C, HW), lambda b: (b, 0, 0)),   # x slab
                pl.BlockSpec((C, R), lambda b: (0, 0)),           # w1^T
                pl.BlockSpec((1, R), lambda b: (0, 0)),           # b1
                pl.BlockSpec((R, C), lambda b: (0, 0)),           # w2^T
                pl.BlockSpec((1, C), lambda b: (0, 0)),           # b2
            ],
            out_specs=pl.BlockSpec((bt, C, HW), lambda b: (b, 0, 0)),
        ),
        compiler_params=pltpu.CompilerParams(
            dimension_semantics=("parallel",),
            vmem_limit_bytes=vmem_limit,
        ),
        cost_estimate=cost,
    )(x_flat, w1t, b1r, w2t, b2r)

    return out_flat.reshape(B, C, H, W)          # free view


def _reference(x, w1, b1, w2, b2):
    # Pure-JAX reference mirroring the PyTorch forward.
    a = jnp.mean(x, axis=(2, 3))                 # (B, C)
    m = jnp.max(x, axis=(2, 3))                  # (B, C)

    def fc(v):
        h = v @ w1.T + b1
        h = jnp.where(h >= 0, h, 0.1 * h)        # LeakyReLU(0.1)
        return h @ w2.T + b2

    y = fc(a) + fc(m)
    y = 2.0 * jax.nn.sigmoid(y)
    return x * y[:, :, None, None]


if __name__ == "__main__":
    key = jax.random.PRNGKey(0)
    B, C, H, W = 2, 4, 16, 16
    num_feat = C
    reduction = 16
    r_feat = max(8, num_feat // reduction)       # = 8

    k_x, k_w1, k_b1, k_w2, k_b2 = jax.random.split(key, 5)
    x = jax.random.normal(k_x, (B, C, H, W), dtype=jnp.float32)

    # Deterministic parameter init (shapes match nn.Linear(num_feat, r_feat), etc.)
    bound1 = 1.0 / (num_feat ** 0.5)
    bound2 = 1.0 / (r_feat ** 0.5)
    w1 = jax.random.uniform(k_w1, (r_feat, num_feat), jnp.float32, -bound1, bound1)
    b1 = jax.random.uniform(k_b1, (r_feat,), jnp.float32, -bound1, bound1)
    w2 = jax.random.uniform(k_w2, (num_feat, r_feat), jnp.float32, -bound2, bound2)
    b2 = jax.random.uniform(k_b2, (num_feat,), jnp.float32, -bound2, bound2)

    out = channel_attention(x, w1, b1, w2, b2)
    out = jax.block_until_ready(out)

    ref = _reference(x, w1, b1, w2, b2)
    assert out.shape == (B, C, H, W)
    assert jnp.allclose(out, ref, atol=1e-5, rtol=1e-5), "mismatch vs reference"

    print("KERNEL_OK")
</pallas_src>

<mosaic_0001>
module attributes {stable_mosaic.version = 11 : i64} {
  func.func @kernel(%arg0: i32, %arg1: memref<1x4x256xf32, #tpu.memory_space<vmem>>, %arg2: memref<4x8xf32, #tpu.memory_space<vmem>>, %arg3: memref<1x8xf32, #tpu.memory_space<vmem>>, %arg4: memref<8x4xf32, #tpu.memory_space<vmem>>, %arg5: memref<1x4xf32, #tpu.memory_space<vmem>>, %arg6: memref<1x4x256xf32, #tpu.memory_space<vmem>>) attributes {dimension_semantics = [#tpu.dimension_semantics<parallel>], iteration_bounds = array<i64: 2>, scalar_prefetch = 0 : i64, scratch_operands = 0 : i64, tpu.core_type = #tpu.core_type<tc>, window_params = [{transform_indices = @transform_0, window_bounds = array<i64: 1, 4, 256>}, {pipeline_mode = #tpu.pipeline_mode<synchronous>, transform_indices = @transform_1, window_bounds = array<i64: 4, 8>}, {pipeline_mode = #tpu.pipeline_mode<synchronous>, transform_indices = @transform_2, window_bounds = array<i64: 1, 8>}, {pipeline_mode = #tpu.pipeline_mode<synchronous>, transform_indices = @transform_3, window_bounds = array<i64: 8, 4>}, {pipeline_mode = #tpu.pipeline_mode<synchronous>, transform_indices = @transform_4, window_bounds = array<i64: 1, 4>}, {transform_indices = @transform_5, window_bounds = array<i64: 1, 4, 256>}]} {
    %c0 = arith.constant 0 : index
    %c0_0 = arith.constant 0 : index
    %c0_1 = arith.constant 0 : index
    %0 = vector.load %arg1[%c0, %c0_0, %c0_1] : memref<1x4x256xf32, #tpu.memory_space<vmem>>, vector<1x4x256xf32>
    %cst = arith.constant dense<0.000000e+00> : vector<1x4xf32>
    %1 = vector.multi_reduction <add>, %0, %cst [2] : vector<1x4x256xf32> to vector<1x4xf32>
    %cst_2 = arith.constant 3.906250e-03 : f32
    %2 = vector.broadcast %cst_2 : f32 to vector<1x4xf32>
    %3 = arith.mulf %1, %2 : vector<1x4xf32>
    %cst_3 = arith.constant dense<0xFF800000> : vector<1x4xf32>
    %4 = vector.multi_reduction <maximumf>, %0, %cst_3 [2] : vector<1x4x256xf32> to vector<1x4xf32>
    %5 = tpu.concatenate %3, %4 in 0 : vector<1x4xf32>, vector<1x4xf32> -> vector<2x4xf32>
    %c0_4 = arith.constant 0 : index
    %c0_5 = arith.constant 0 : index
    %6 = vector.load %arg2[%c0_4, %c0_5] : memref<4x8xf32, #tpu.memory_space<vmem>>, vector<4x8xf32>
    %cst_6 = arith.constant dense<0.000000e+00> : vector<2x8xf32>
    %7 = tpu.matmul %5, %6, %cst_6 {dimension_numbers = #tpu.dot_dimension_numbers<[1], [0], [0], [1], [0, 0, 1, 1], [], []>} : vector<2x4xf32>, vector<4x8xf32>, vector<2x8xf32> -> vector<2x8xf32>
    %c0_7 = arith.constant 0 : index
    %c0_8 = arith.constant 0 : index
    %8 = vector.load %arg3[%c0_7, %c0_8] : memref<1x8xf32, #tpu.memory_space<vmem>>, vector<1x8xf32>
    %9 = vector.broadcast %8 : vector<1x8xf32> to vector<2x8xf32>
    %10 = arith.addf %7, %9 : vector<2x8xf32>
    %cst_9 = arith.constant 0.000000e+00 : f32
    %11 = vector.broadcast %cst_9 : f32 to vector<2x8xf32>
    %12 = arith.cmpf oge, %10, %11 : vector<2x8xf32>
    %cst_10 = arith.constant 1.000000e-01 : f32
    %13 = vector.broadcast %cst_10 : f32 to vector<2x8xf32>
    %14 = arith.mulf %13, %10 : vector<2x8xf32>
    %15 = arith.select %12, %10, %14 : vector<2x8xi1>, vector<2x8xf32>
    %c0_11 = arith.constant 0 : index
    %c0_12 = arith.constant 0 : index
    %16 = vector.load %arg4[%c0_11, %c0_12] : memref<8x4xf32, #tpu.memory_space<vmem>>, vector<8x4xf32>
    %cst_13 = arith.constant dense<0.000000e+00> : vector<2x4xf32>
    %17 = tpu.matmul %15, %16, %cst_13 {dimension_numbers = #tpu.dot_dimension_numbers<[1], [0], [0], [1], [0, 0, 1, 1], [], []>} : vector<2x8xf32>, vector<8x4xf32>, vector<2x4xf32> -> vector<2x4xf32>
    %c0_14 = arith.constant 0 : index
    %c0_15 = arith.constant 0 : index
    %18 = vector.load %arg5[%c0_14, %c0_15] : memref<1x4xf32, #tpu.memory_space<vmem>>, vector<1x4xf32>
    %19 = vector.broadcast %18 : vector<1x4xf32> to vector<2x4xf32>
    %20 = arith.addf %17, %19 : vector<2x4xf32>
    %21 = vector.extract_strided_slice %20 {offsets = [0, 0], sizes = [1, 4], strides = [1, 1]} : vector<2x4xf32> to vector<1x4xf32>
    %22 = vector.extract_strided_slice %20 {offsets = [1, 0], sizes = [1, 4], strides = [1, 1]} : vector<2x4xf32> to vector<1x4xf32>
    %23 = arith.addf %21, %22 : vector<1x4xf32>
    %24 = arith.negf %23 : vector<1x4xf32>
    %25 = math.exp %24 : vector<1x4xf32>
    %cst_16 = arith.constant 1.000000e+00 : f32
    %26 = vector.broadcast %cst_16 : f32 to vector<1x4xf32>
    %27 = arith.addf %26, %25 : vector<1x4xf32>
    %28 = arith.divf %26, %27 : vector<1x4xf32>
    %cst_17 = arith.constant 2.000000e+00 : f32
    %29 = vector.broadcast %cst_17 : f32 to vector<1x4xf32>
    %30 = arith.mulf %29, %28 : vector<1x4xf32>
    %31 = vector.shape_cast %30 : vector<1x4xf32> to vector<1x4x1xf32>
    %32 = vector.broadcast %31 : vector<1x4x1xf32> to vector<1x4x256xf32>
    %33 = arith.mulf %0, %32 : vector<1x4x256xf32>
    %c0_18 = arith.constant 0 : index
    %c0_19 = arith.constant 0 : index
    %c0_20 = arith.constant 0 : index
    %34 = vector.load %arg6[%c0_18, %c0_19, %c0_20] : memref<1x4x256xf32, #tpu.memory_space<vmem>>, vector<1x4x256xf32>
    tpu.vector_store %arg6[%c0_18, %c0_19, %c0_20], %33 {strides = array<i32>} : memref<1x4x256xf32, #tpu.memory_space<vmem>>, vector<1x4x256xf32>,
    return
  }
  func.func @transform_0(%arg0: i32) -> (i32, i32, i32) {
    %c0_i32 = arith.constant 0 : i32
    %c0_i32_0 = arith.constant 0 : i32
    %c0_i32_1 = arith.constant 0 : i32
    return %arg0, %c0_i32, %c0_i32_0 : i32, i32, i32
  }
  func.func @transform_1(%arg0: i32) -> (i32, i32) {
    %c0_i32 = arith.constant 0 : i32
    %c0_i32_0 = arith.constant 0 : i32
    %c0_i32_1 = arith.constant 0 : i32
    return %c0_i32, %c0_i32_0 : i32, i32
  }
  func.func @transform_2(%arg0: i32) -> (i32, i32) {
    %c0_i32 = arith.constant 0 : i32
    %c0_i32_0 = arith.constant 0 : i32
    %c0_i32_1 = arith.constant 0 : i32
    return %c0_i32, %c0_i32_0 : i32, i32
  }
  func.func @transform_3(%arg0: i32) -> (i32, i32) {
    %c0_i32 = arith.constant 0 : i32
    %c0_i32_0 = arith.constant 0 : i32
    %c0_i32_1 = arith.constant 0 : i32
    return %c0_i32, %c0_i32_0 : i32, i32
  }
  func.func @transform_4(%arg0: i32) -> (i32, i32) {
    %c0_i32 = arith.constant 0 : i32
    %c0_i32_0 = arith.constant 0 : i32
    %c0_i32_1 = arith.constant 0 : i32
    return %c0_i32, %c0_i32_0 : i32, i32
  }
  func.func @transform_5(%arg0: i32) -> (i32, i32, i32) {
    %c0_i32 = arith.constant 0 : i32
    %c0_i32_0 = arith.constant 0 : i32
    %c0_i32_1 = arith.constant 0 : i32
    return %arg0, %c0_i32, %c0_i32_0 : i32, i32, i32
  }
}

</mosaic_0001>

<llo_original>
// kernel: tpu_custom_call.1
$region0: #{tpu_custom_call.1}
  #allocation0 [shape = 'u32[]', space=smem, size = 0x4, offset = 0x4, fixed_abs, tag = 'smem constant byte address 0x4 - core index']
  #allocation1 [shape = 'u32[72,128]{1,0:T(1,128)}', space=vmem, size = 0x9000, scoped, tag = 'internal scratch']
  %s0 = inlined_call_operand.hbm [shape: f32[2,4,256], index: 0, kind: input, shape index: {}]
  %s1 = inlined_call_operand.vmem [shape: f32[4,8], index: 1, kind: input, shape index: {}]
  %s2 = inlined_call_operand.vmem [shape: f32[1,8], index: 2, kind: input, shape index: {}]
  %s3 = inlined_call_operand.vmem [shape: f32[8,4], index: 3, kind: input, shape index: {}]
  %s4 = inlined_call_operand.vmem [shape: f32[1,4], index: 4, kind: input, shape index: {}]
  %s5 = inlined_call_operand.hbm [shape: f32[2,4,256], index: 5, kind: output, shape index: {}]
  %s6 = sld [smem:[#allocation0]]
  $region57: #{tpu_custom_call.1} parent=0
    _
  %s8 = ssub.s32 1, %s6
  %s9 = scalar_select 0, %s8, %s6
  $region1: #{tpu_custom_call.1} parent=0
    #allocation2 [shape = 'u8[8192]{0}', space=vmem, size = 0x2000, scoped, tag = 'input window, operand 0']
    #allocation3 [shape = 's32[2]{0}', space=sflag, size = 0x8, scoped, tag = 'scoped memory for tpu_custom_call.1']
    #allocation4 [shape = 's32[2]{0}', space=sflag, size = 0x8, scoped, tag = 'scoped memory for tpu_custom_call.1']
    #allocation5 [shape = 'u8[8192]{0}', space=vmem, size = 0x2000, scoped, tag = 'output window, operand 0']
    %10 = vsyncpa [#allocation3], 0
    %s11 = scalar_lea.sflag [#allocation3], 1
    %12 = vsyncpa %s11, 0
    %13 = vsyncpa [#allocation4], 0
    %s14 = scalar_lea.sflag [#allocation4], 1
    %15 = vsyncpa %s14, 0
    loop: start=0, step=1, limit=4
    $region2: #{tpu_custom_call.1} parent=1 // loop_pre_header
      _
    $region3: #{tpu_custom_call.1} parent=1 // loop_header
      %s17 = sphi 0, %s21
      %p18 = scmp.ge.s32.totalorder %s17, 4
      %s27 = sphi 0, %s29
      %s30 = sphi 0, %s27
      %s31 = sphi 0, %s30
      %s47 = sphi 0, %s31
      %s51 = sphi 0, %s51
      %s53 = sphi 0, %s51
      %s54 = sphi 0, %s53
      %s68 = sphi 0, %s54
      %s72 = sphi 0, %s72
      %s74 = sphi 0, %s72
      %s75 = sphi 0, %s74
      %s89 = sphi 0, %s75
      %s93 = sphi 0, %s93
      %s95 = sphi 0, %s93
      %s96 = sphi 0, %s95
      %s110 = sphi 0, %s96
      %s114 = sphi 0, %s114
      %s116 = sphi 0, %s114
      %s117 = sphi 0, %s116
      %s131 = sphi 0, %s117
      %s137 = sphi 0, %s139
      %s140 = sphi 0, %s137
      %s141 = sphi 0, %s140
      %s157 = sphi 0, %s141
    $region4: #{tpu_custom_call.1} parent=1 // loop_header_branch
      %20 = sbr.rel (%p18) target = $region8
    $region5: #{tpu_custom_call.1} parent=1 // loop_body
      %s22 = ssub.s32 %s17, 1
      %s23 = ssub.s32 %s17, 2
      %s24 = sadd.s32 %s17, 1
      %s25 = ssub.s32 %s17, %s24
      %p26 = scmp.eq.s32.totalorder %s25, 0
      %s28 = sadd.s32 %s27, 1
      %s29 = scalar_select %p26, %s27, %s28
      %p32 = pneg %p26
      %p33 = scmp.eq.s32.totalorder %s17, 1
      %p34 = por %p32, %p33
      %p35 = scmp.ne.s32.totalorder %s27, %s30
      %p36 = scmp.eq.s32.totalorder %s17, 0
      %p37 = por %p35, %p36
      %p38 = scmp.ne.s32.totalorder %s27, %s30
      %p39 = scmp.eq.s32.totalorder %s22, 1
      %p40 = por %p38, %p39
      %p41 = scmp.ne.s32.totalorder %s30, %s31
      %p42 = scmp.eq.s32.totalorder %s22, 0
      %p43 = por %p41, %p42
      %p44 = scmp.ne.s32.totalorder %s30, %s31
      %p45 = scmp.eq.s32.totalorder %s23, 1
      %p46 = por %p44, %p45
      %p48 = scmp.ne.s32.totalorder %s31, %s47
      %p49 = scmp.eq.s32.totalorder %s23, 0
      %p50 = por %p48, %p49
      %s52 = sadd.s32 %s51, 1
      %p55 = scmp.eq.s32.totalorder %s17, 1
      %p56 = scmp.ne.s32.totalorder %s51, %s53
      %p57 = scmp.eq.s32.totalorder %s17, 0
      %p58 = por %p56, %p57
      %p59 = scmp.ne.s32.totalorder %s51, %s53
      %p60 = scmp.eq.s32.totalorder %s22, 1
      %p61 = por %p59, %p60
      %p62 = scmp.ne.s32.totalorder %s53, %s54
      %p63 = scmp.eq.s32.totalorder %s22, 0
      %p64 = por %p62, %p63
      %p65 = scmp.ne.s32.totalorder %s53, %s54
      %p66 = scmp.eq.s32.totalorder %s23, 1
      %p67 = por %p65, %p66
      %p69 = scmp.ne.s32.totalorder %s54, %s68
      %p70 = scmp.eq.s32.totalorder %s23, 0
      %p71 = por %p69, %p70
      %s73 = sadd.s32 %s72, 1
      %p76 = scmp.eq.s32.totalorder %s17, 1
      %p77 = scmp.ne.s32.totalorder %s72, %s74
      %p78 = scmp.eq.s32.totalorder %s17, 0
      %p79 = por %p77, %p78
      %p80 = scmp.ne.s32.totalorder %s72, %s74
      %p81 = scmp.eq.s32.totalorder %s22, 1
      %p82 = por %p80, %p81
      %p83 = scmp.ne.s32.totalorder %s74, %s75
      %p84 = scmp.eq.s32.totalorder %s22, 0
      %p85 = por %p83, %p84
      %p86 = scmp.ne.s32.totalorder %s74, %s75
      %p87 = scmp.eq.s32.totalorder %s23, 1
      %p88 = por %p86, %p87
      %p90 = scmp.ne.s32.totalorder %s75, %s89
      %p91 = scmp.eq.s32.totalorder %s23, 0
      %p92 = por %p90, %p91
      %s94 = sadd.s32 %s93, 1
      %p97 = scmp.eq.s32.totalorder %s17, 1
      %p98 = scmp.ne.s32.totalorder %s93, %s95
      %p99 = scmp.eq.s32.totalorder %s17, 0
      %p100 = por %p98, %p99
      %p101 = scmp.ne.s32.totalorder %s93, %s95
      %p102 = scmp.eq.s32.totalorder %s22, 1
      %p103 = por %p101, %p102
      %p104 = scmp.ne.s32.totalorder %s95, %s96
      %p105 = scmp.eq.s32.totalorder %s22, 0
      %p106 = por %p104, %p105
      %p107 = scmp.ne.s32.totalorder %s95, %s96
      %p108 = scmp.eq.s32.totalorder %s23, 1
      %p109 = por %p107, %p108
      %p111 = scmp.ne.s32.totalorder %s96, %s110
      %p112 = scmp.eq.s32.totalorder %s23, 0
      %p113 = por %p111, %p112
      %s115 = sadd.s32 %s114, 1
      %p118 = scmp.eq.s32.totalorder %s17, 1
      %p119 = scmp.ne.s32.totalorder %s114, %s116
      %p120 = scmp.eq.s32.totalorder %s17, 0
      %p121 = por %p119, %p120
      %p122 = scmp.ne.s32.totalorder %s114, %s116
      %p123 = scmp.eq.s32.totalorder %s22, 1
      %p124 = por %p122, %p123
      %p125 = scmp.ne.s32.totalorder %s116, %s117
      %p126 = scmp.eq.s32.totalorder %s22, 0
      %p127 = por %p125, %p126
      %p128 = scmp.ne.s32.totalorder %s116, %s117
      %p129 = scmp.eq.s32.totalorder %s23, 1
      %p130 = por %p128, %p129
      %p132 = scmp.ne.s32.totalorder %s117, %s131
      %p133 = scmp.eq.s32.totalorder %s23, 0
      %p134 = por %p132, %p133
      %s135 = ssub.s32 %s17, %s24
      %p136 = scmp.eq.s32.totalorder %s135, 0
      %s138 = sadd.s32 %s137, 1
      %s139 = scalar_select %p136, %s137, %s138
      %p142 = pneg %p136
      %p143 = scmp.eq.s32.totalorder %s17, 1
      %p144 = por %p142, %p143
      %p145 = scmp.ne.s32.totalorder %s137, %s140
      %p146 = scmp.eq.s32.totalorder %s17, 0
      %p147 = por %p145, %p146
      %p148 = scmp.ne.s32.totalorder %s137, %s140
      %p149 = scmp.eq.s32.totalorder %s22, 1
      %p150 = por %p148, %p149
      %p151 = scmp.ne.s32.totalorder %s140, %s141
      %p152 = scmp.eq.s32.totalorder %s22, 0
      %p153 = por %p151, %p152
      %p154 = scmp.ne.s32.totalorder %s140, %s141
      %p155 = scmp.eq.s32.totalorder %s23, 1
      %p156 = por %p154, %p155
      %p158 = scmp.ne.s32.totalorder %s141, %s157
      %p159 = scmp.eq.s32.totalorder %s23, 0
      %p160 = por %p158, %p159
      %p161 = scmp.le.s32.totalorder 1, %s17
      %p162 = scmp.lt.s32.totalorder %s17, 3
      %p163 = pnand %p161, %p162
      %p164 = pneg %p163
      // Predicated region
      $region9: #{tpu_custom_call.1} parent=5 // pred_check
        _
      $region10: #{tpu_custom_call.1} parent=5 // pred_check_branch
        %166 = sbr.rel (%p163) target = $region12
      $region11: #{tpu_custom_call.1} parent=5 // pred_region
        %s167 = ssub.s32 %s17, 1
        // Predicated region
        $region13: #{tpu_custom_call.1} parent=11 // pred_check
          %p168 = pneg %p64
        $region14: #{tpu_custom_call.1} parent=11 // pred_check_branch
          %170 = sbr.rel (%p168) target = $region16
        $region15: #{tpu_custom_call.1} parent=11 // pred_region
          _
        $region16: #{tpu_custom_call.1} parent=11 // pred_fallthru
          _
        // Predicated region
        $region17: #{tpu_custom_call.1} parent=11 // pred_check
          %p171 = pneg %p85
        $region18: #{tpu_custom_call.1} parent=11 // pred_check_branch
          %173 = sbr.rel (%p171) target = $region20
        $region19: #{tpu_custom_call.1} parent=11 // pred_region
          _
        $region20: #{tpu_custom_call.1} parent=11 // pred_fallthru
          _
        // Predicated region
        $region21: #{tpu_custom_call.1} parent=11 // pred_check
          %p174 = pneg %p106
        $region22: #{tpu_custom_call.1} parent=11 // pred_check_branch
          %176 = sbr.rel (%p174) target = $region24
        $region23: #{tpu_custom_call.1} parent=11 // pred_region
          _
        $region24: #{tpu_custom_call.1} parent=11 // pred_fallthru
          _
        // Predicated region
        $region25: #{tpu_custom_call.1} parent=11 // pred_check
          %p177 = pneg %p127
        $region26: #{tpu_custom_call.1} parent=11 // pred_check_branch
          %179 = sbr.rel (%p177) target = $region28
        $region27: #{tpu_custom_call.1} parent=11 // pred_region
          _
        $region28: #{tpu_custom_call.1} parent=11 // pred_fallthru
          _
      $region12: #{tpu_custom_call.1} parent=5 // pred_fallthru
        _
      %p180 = scmp.lt.s32.totalorder %s17, 2
      // Predicated region
      $region29: #{tpu_custom_call.1} parent=5 // pred_check
        %p181 = pneg %p180
      $region30: #{tpu_custom_call.1} parent=5 // pred_check_branch
        %183 = sbr.rel (%p181) target = $region32
      $region31: #{tpu_custom_call.1} parent=5 // pred_region
        // Predicated region
        $region33: #{tpu_custom_call.1} parent=31 // pred_check
          %p184 = pneg %p37
        $region34: #{tpu_custom_call.1} parent=31 // pred_check_branch
          %186 = sbr.rel (%p184) target = $region36
        $region35: #{tpu_custom_call.1} parent=31 // pred_region
          %s187 = sand.u32 %s27, 1
          %s188 = scalar_lea.sflag [#allocation3], %s187
          %s189 = sand.u32 %s27, 1
          %s190 = smul.addr %s189, 8
          %s191 = scalar_lea.vmem [#allocation2], %s190
          %193 = vsyncadd %s188, 0
          %s194 = smul.addr %s17, 2
          %s195 = smul.addr %s194, 4
          %s196 = scalar_lea.hbm %s0, %s195
          %s198 = sshll.u32 %s196, 4
          %s199 = int_to_ptr.hbm [resolvable:$true] %s198
          %s200 = sshll.u32 %s191, 4
          %s201 = int_to_ptr.vmem [resolvable:$true] %s200
          %203 = dma.hbm_to_vmem [thread:$0]  %s199, 128, %s201, %s188
        $region36: #{tpu_custom_call.1} parent=31 // pred_fallthru
          _
      $region32: #{tpu_custom_call.1} parent=5 // pred_fallthru
        _
      %p204 = scmp.le.s32.totalorder 1, %s17
      %p205 = scmp.lt.s32.totalorder %s17, 3
      %p206 = pnand %p204, %p205
      %p207 = pneg %p206
      // Predicated region
      $region37: #{tpu_custom_call.1} parent=5 // pred_check
        _
      $region38: #{tpu_custom_call.1} parent=5 // pred_check_branch
        %209 = sbr.rel (%p206) target = $region40
      $region39: #{tpu_custom_call.1} parent=5 // pred_region
        %s210 = ssub.s32 %s17, 1
        %s211 = sand.u32 %s30, 1
        %s212 = scalar_lea.sflag [#allocation3], %s211
        %s213 = sand.u32 %s30, 1
        %s214 = smul.addr %s213, 8
        %s215 = scalar_lea.vmem [#allocation2], %s214
        // Predicated region
        $region41: #{tpu_custom_call.1} parent=39 // pred_check
          %p216 = pneg %p43
        $region42: #{tpu_custom_call.1} parent=39 // pred_check_branch
          %218 = sbr.rel (%p216) target = $region44
        $region43: #{tpu_custom_call.1} parent=39 // pred_region
          %220 = dma.done %s212, 128
        $region44: #{tpu_custom_call.1} parent=39 // pred_fallthru
          _
        %s221 = sand.u32 %s30, 1
        %s222 = scalar_lea.sflag [#allocation3], %s221
        %s223 = sand.u32 %s30, 1
        %s224 = smul.addr %s223, 8
        %s225 = scalar_lea.vmem [#allocation2], %s224
        %p226 = pneg %p43
        %p227 = pneg %p40
        %p228 = pneg %p64
        %p229 = pneg %p61
        %p230 = pneg %p85
        %p231 = pneg %p82
        %p232 = pneg %p106
        %p233 = pneg %p103
        %p234 = pneg %p127
        %p235 = pneg %p124
        %p236 = pneg %p153
        %p237 = pneg %p150
        %s238 = sand.u32 %s140, 1
        %s239 = scalar_lea.sflag [#allocation4], %s238
        %s240 = sand.u32 %s140, 1
        %s241 = smul.addr %s240, 8
        %s242 = scalar_lea.vmem [#allocation5], %s241
        %v243 = vld [vmem:[%s215] sm:$0xff]
        %245 = vst [vmem:[#allocation1] ss:$2 sm:$0xff] %v243
        %v246 = vld.sshfl [vmem:[#allocation1] sm:$0xff pattern:$0x75316420]
        %v247 = vld.sshfl [vmem:[#allocation1 + $0x8] sm:$0xff pattern:$0x75316420]
        %vm250 = vcmask 1043456
        %v251 = vsel %vm250, %v246, 0.0
        %v252 = vsel %vm250, %v247, 0.0
        %v253 = vadd.f32 %v251, %v252
        %254 = vadd.xlane.f32.xlu0 %v253
        %v255 = vpop.xlane.xlu0 %254
        %v256 = vmul.f32 %v255, 0.00390625
        %257 = vst [vmem:[#allocation1] ss:$2 sm:$0xff] %v243
        %v258 = vld.sshfl [vmem:[#allocation1] sm:$0xff pattern:$0x75316420]
        %v259 = vld.sshfl [vmem:[#allocation1 + $0x8] sm:$0xff pattern:$0x75316420]
        %v262 = vsel %vm250, %v258, -inf
        %v263 = vsel %vm250, %v259, -inf
        %v264 = vmax.f32 %v262, %v263
        %265 = vmax.xlane.f32.xlu0 %v264
        %v266 = vpop.xlane.xlu0 %265
        %v268 = vlaneseq
        %v269 = vand.u32 %v268, 127
        %v270 = vperm.slane %v256, %v269
        %v273 = vperm.slane %v266, %v269
        %vm275 = vcmask 1040384
        %v276 = vsel %vm275, %v270, %v273
        %v277 = vld [vmem:[%s1] sm:$0xf]
        %v278 = vld [vmem:[%s2] sm:$0x1]
        %v280 = vperm.slane %v278, 0
        %vm282 = vcmask 31744
        %v284 = vsel %vm282, %v276, 0
        %v287 = vsel %vm250, %v277, 0
        %289 = vmatpush.msra.mxu0 0.0
        %290 = vmatpush.msra.mxu0 0.0
        %291 = vmatpush.msra.mxu0 0.0
        %292 = vmatpush.msra.mxu0 0.0
        %293 = vmatpush.msra.mxu0 0.0
        %294 = vmatpush.msra.mxu0 0.0
        %295 = vmatpush.msra.mxu0 0.0
        %296 = vmatpush.msra.mxu0 0.0
        %297 = vmatpush.msra.mxu0 0.0
        %298 = vmatpush.msra.mxu0 0.0
        %299 = vmatpush.msra.mxu0 0.0
        %300 = vmatpush.msra.mxu0 0.0
        %301 = vmatpush.msra.mxu0 0.0
        %302 = vmatpush.msra.mxu0 0.0
        %303 = vmatpush.msra.mxu0 0.0
        %304 = vmatpush.msra.mxu0 %v287
        %305 = vmatmul.f32.gmra.mxu0 %v284
        %v306 = vpop.f32.mrf.mxu0
        %v307 = vadd.f32 %v280, %v306
        %308 = vdwg.mxu0
        %vm309 = vcmp.ge.f32.partialorder %v307, 0.0
        %v310 = vmul.f32 %v307, 0.1
        %v311 = vsel %vm309, %v307, %v310
        %v312 = vld [vmem:[%s3] sm:$0xff]
        %v313 = vld [vmem:[%s4] sm:$0x1]
        %v315 = vperm.slane %v313, 0
        %vm317 = vcmask 64512
        %v319 = vsel %vm317, %v311, 0
        %321 = vmatpush.msra.mxu0 0.0
        %322 = vmatpush.msra.mxu0 0.0
        %323 = vmatpush.msra.mxu0 0.0
        %324 = vmatpush.msra.mxu0 0.0
        %325 = vmatpush.msra.mxu0 0.0
        %326 = vmatpush.msra.mxu0 0.0
        %327 = vmatpush.msra.mxu0 0.0
        %328 = vmatpush.msra.mxu0 0.0
        %329 = vmatpush.msra.mxu0 0.0
        %330 = vmatpush.msra.mxu0 0.0
        %331 = vmatpush.msra.mxu0 0.0
        %332 = vmatpush.msra.mxu0 0.0
        %333 = vmatpush.msra.mxu0 0.0
        %334 = vmatpush.msra.mxu0 0.0
        %335 = vmatpush.msra.mxu0 0.0
        %336 = vmatpush.msra.mxu0 %v312
        %337 = vmatmul.f32.gmra.mxu0 %v319
        %v338 = vpop.f32.mrf.mxu0
        %v339 = vadd.f32 %v315, %v338
        %340 = vdwg.mxu0
        %v342 = vrot.slane %v339, 1
        %v344 = vadd.f32 %v339, %v342
        %v345 = vxor.u32 %v344, 2147483648
        %v346 = vmul.f32 %v345, 1.442695
        %v347 = vpow.pop %v346
        %v348 = vadd.f32 %v347, 1.0
        %v349 = vrcp.pop %v348
        %v350 = vmul.f32 %v348, %v349
        %v351 = vsub.f32 1.0, %v350
        %v352 = vmul.f32 %v349, %v351
        %v353 = vadd.f32 %v349, %v352
        %vm354 = vweird.f32 %v348
        %vm355 = vweird.f32 %v349
        %vm356 = vmor %vm354, %vm355
        %v357 = vsel %vm356, %v349, %v353
        %v358 = vand.u32 2147483647, %v348
        %vm359 = vcmp.eq.f32.partialorder %v358, 8.507059e+37
        %v360 = vand.u32 %v348, 2147483648
        %v361 = vor.u32 1.1754944e-38, %v360
        %v362 = vsel %vm359, %v361, %v357
        %v363 = vmul.f32 1.0, %v362
        %v364 = vmul.f32 %v363, 2.0
        %v365 = vperm.slane %v364, 0
        %v366 = vlaneseq
        %v367 = vshrl.u32 %v366, 7
        %369 = vset.pattern.permute.xlu0 %v367
        %370 = vperm.xlu0 %369, %v365
        %v371 = vpop.permute.xlu0 %370
        %v374 = vunpack.c.l.s4 839922192
        %v375 = vunpack.c.0.s8 %v374
        %v376 = vperm.slane %v371, %v375
        %v378 = vmul.f32 %v243, %v376
        %379 = vst [vmem:[%s242] sm:$0xff] %v378
        %s380 = sand.u32 %s140, 1
        %s381 = scalar_lea.sflag [#allocation4], %s380
        %s382 = sand.u32 %s140, 1
        %s383 = smul.addr %s382, 8
        %s384 = scalar_lea.vmem [#allocation5], %s383
        // Predicated region
        $region45: #{tpu_custom_call.1} parent=39 // pred_check
          %p385 = pneg %p150
        $region46: #{tpu_custom_call.1} parent=39 // pred_check_branch
          %387 = sbr.rel (%p385) target = $region48
        $region47: #{tpu_custom_call.1} parent=39 // pred_region
          %389 = vsyncadd %s381, 0
          %s390 = smul.addr %s22, 2
          %s391 = smul.addr %s390, 4
          %s392 = scalar_lea.hbm %s5, %s391
          %s394 = sshll.u32 %s384, 4
          %s395 = int_to_ptr.vmem [resolvable:$true] %s394
          %s396 = sshll.u32 %s392, 4
          %s397 = int_to_ptr.hbm [resolvable:$true] %s396
          %399 = dma.vmem_to_hbm [thread:$0]  %s395, 128, %s397, %s381
        $region48: #{tpu_custom_call.1} parent=39 // pred_fallthru
          _
      $region40: #{tpu_custom_call.1} parent=5 // pred_fallthru
        _
      %p400 = scmp.le.s32.totalorder 2, %s17
      // Predicated region
      $region49: #{tpu_custom_call.1} parent=5 // pred_check
        %p401 = pneg %p400
      $region50: #{tpu_custom_call.1} parent=5 // pred_check_branch
        %403 = sbr.rel (%p401) target = $region52
      $region51: #{tpu_custom_call.1} parent=5 // pred_region
        %s404 = ssub.s32 %s17, 2
        // Predicated region
        $region53: #{tpu_custom_call.1} parent=51 // pred_check
          %p405 = pneg %p156
        $region54: #{tpu_custom_call.1} parent=51 // pred_check_branch
          %407 = sbr.rel (%p405) target = $region56
        $region55: #{tpu_custom_call.1} parent=51 // pred_region
          %s408 = sand.u32 %s141, 1
          %s409 = scalar_lea.sflag [#allocation4], %s408
          %s410 = sand.u32 %s141, 1
          %s411 = smul.addr %s410, 8
          %s412 = scalar_lea.vmem [#allocation5], %s411
          %414 = dma.done %s409, 128
        $region56: #{tpu_custom_call.1} parent=51 // pred_fallthru
          _
      $region52: #{tpu_custom_call.1} parent=5 // pred_fallthru
        _
    $region6: #{tpu_custom_call.1} parent=1 // loop_footer
      %s21 = sadd.s32 1, %s17
    $region7: #{tpu_custom_call.1} parent=1 // loop_footer_branch
      %16 = sbr.rel target = $region3
    $region8: #{tpu_custom_call.1} parent=1 // loop_exit
      _
    %415 = vsyncpa [#allocation3], 1
    %s416 = scalar_lea.sflag [#allocation3], 1
    %417 = vsyncpa %s416, 1
    %418 = vsyncpa [#allocation4], 1
    %s419 = scalar_lea.sflag [#allocation4], 1
    %420 = vsyncpa %s419, 1

</llo_original>
